<compile_context>
chip_gen: v7x
topology: tpu7x:2x2x1
jax: 0.10.0
libtpu: 0.0.40
codegen_flags: <defaults>
</compile_context>

<pallas_src>
import math

import jax
import jax.numpy as jnp
from jax.experimental import pallas as pl
from jax.experimental.pallas import tpu as pltpu


def _round_up(x, m):
    return ((x + m - 1) // m) * m


def _matmul_kernel(x_ref, w_ref, o_ref, acc_ref):
    # x_ref: (tm, tk), w_ref: (tk, tn)  -- weight is pre-transposed (K-major) at init,
    # so this is the canonical MXU contraction with no per-tile relayout.
    @pl.when(pl.program_id(2) == 0)
    def _():
        acc_ref[...] = jnp.zeros_like(acc_ref)

    acc_ref[...] += jnp.dot(
        x_ref[...], w_ref[...], preferred_element_type=jnp.float32
    )

    @pl.when(pl.program_id(2) == pl.num_programs(2) - 1)
    def _():
        o_ref[...] = acc_ref[...].astype(o_ref.dtype)


def xavier_uniform_weight(key, in_features, out_features):
    # nn.init.xavier_uniform_: U(-a, a), a = sqrt(6 / (fan_in + fan_out)); torch layout (N, K).
    bound = math.sqrt(6.0 / (in_features + out_features))
    return jax.random.uniform(
        key, (out_features, in_features), jnp.float32, -bound, bound
    )


def prepare_linear_norm_params(weight, *, dtype=None, tn_max=1024, tk_max=1024):
    """One-time weight prep, hoisted out of the per-call forward path.

    weight: (out_features, in_features) in PyTorch layout.
    Returns params dict holding a K-major, lane/tile-aligned, (optionally pre-cast)
    weight of shape (Kp, Np) plus the tile sizes it was padded for.
    """
    out_features, in_features = weight.shape
    if dtype is not None and weight.dtype != dtype:
        weight = weight.astype(dtype)

    tn = min(tn_max, _round_up(out_features, 128))
    tk = min(tk_max, _round_up(in_features, 128))
    np_ = _round_up(out_features, tn)
    kp = _round_up(in_features, tk)

    if (np_, kp) != (out_features, in_features):
        weight = jnp.pad(weight, ((0, np_ - out_features), (0, kp - in_features)))
    weight_t = jnp.asarray(weight.T)  # (Kp, Np), K-major; materialized once here.

    return {
        "weight_t": weight_t,
        "in_features": in_features,
        "out_features": out_features,
        "tn": tn,
        "tk": tk,
    }


def init_linear_norm_params(key, in_features, out_features, dtype=jnp.float32, **kw):
    return prepare_linear_norm_params(
        xavier_uniform_weight(key, in_features, out_features), dtype=dtype, **kw
    )


def linear_norm_forward(x, params, *, tm_max=512):
    """y = x @ W.T  (nn.Linear with bias=False), W pre-prepared by prepare_linear_norm_params."""
    wt = params["weight_t"]              # (Kp, Np), K-major
    K = params["in_features"]
    N = params["out_features"]
    tn = params["tn"]
    tk = params["tk"]
    Kp, Np = wt.shape

    assert x.shape[-1] == K, f"expected last dim {K}, got {x.shape[-1]}"
    lead = x.shape[:-1]
    x2d = x.reshape(-1, K)
    M = x2d.shape[0]

    if x2d.dtype != wt.dtype:
        # Fallback only; prefer preparing the weight in the activation dtype at init.
        x2d = x2d.astype(wt.dtype)

    itemsize = jnp.dtype(x2d.dtype).itemsize
    # Packed-sublane alignment for the dtype: 8 (f32), 16 (bf16), 32 (int8/fp8).
    m_align = max(8, 8 * (4 // max(1, itemsize)))

    tm = _round_up(min(tm_max, _round_up(M, m_align)), m_align)
    grid_m = pl.cdiv(M, tm)
    grid_n = Np // tn
    # v7x has 2 TensorCores; keep >= 2 blocks along a parallel axis when possible.
    if grid_m == 1 and grid_n == 1 and M > m_align:
        tm = _round_up(-(-M // 2), m_align)
        grid_m = pl.cdiv(M, tm)
    grid_k = Kp // tk

    # Pad only K of the activations (padded K columns meet zero weight rows -> exact
    # zeros in the reduction). The M edge is covered by partial grid blocks: their
    # out-of-range rows read undefined data but are never written back.
    if Kp != K:
        x2d = jnp.pad(x2d, ((0, 0), (0, Kp - K)))

    # VMEM: double-buffered x/w/out tiles + f32 accumulator, with headroom.
    vmem_bytes = (
        2 * (tm * tk + tk * tn) * itemsize
        + 2 * tm * tn * itemsize
        + tm * tn * 4
    )
    vmem_limit = int(
        min(
            max(32 * 1024 * 1024, int(vmem_bytes * 1.25) + (1 << 20)),
            48 * 1024 * 1024,  # stay well under v7x's 64 MiB/TC physical VMEM
        )
    )

    cost = pl.CostEstimate(
        flops=2 * M * Np * Kp,
        transcendentals=0,
        bytes_accessed=(grid_n * M * Kp + grid_m * Kp * Np + M * Np) * itemsize,
    )

    out = pl.pallas_call(
        _matmul_kernel,
        out_shape=jax.ShapeDtypeStruct((M, Np), x2d.dtype),
        grid_spec=pltpu.PrefetchScalarGridSpec(
            num_scalar_prefetch=0,
            grid=(grid_m, grid_n, grid_k),
            in_specs=[
                pl.BlockSpec((tm, tk), lambda i, j, k: (i, k)),  # activations
                pl.BlockSpec((tk, tn), lambda i, j, k: (k, j)),  # K-major weight
            ],
            out_specs=pl.BlockSpec((tm, tn), lambda i, j, k: (i, j)),
            scratch_shapes=[pltpu.VMEM((tm, tn), jnp.float32)],
        ),
        compiler_params=pltpu.CompilerParams(
            dimension_semantics=("parallel", "parallel", "arbitrary"),
            vmem_limit_bytes=vmem_limit,
        ),
        cost_estimate=cost,
    )(x2d, wt)

    if Np != N:
        out = out[:, :N]  # drop lane padding of out_features (cheap, N-pad < 128 cols)
    return out.reshape(*lead, N)


if __name__ == "__main__":
    key = jax.random.PRNGKey(0)
    k_w, k_x, k_w2, k_x2 = jax.random.split(key, 4)

    # ---- Test 1: small f32, module-like shapes (exercises K/N lane padding + M edge blocks)
    batch, seq, in_f, out_f = 2, 8, 32, 64
    w1 = xavier_uniform_weight(k_w, in_f, out_f)          # (64, 32), torch layout
    params1 = prepare_linear_norm_params(w1)              # one-time prep
    x1 = jax.random.normal(k_x, (batch, seq, in_f), dtype=jnp.float32)

    y1 = linear_norm_forward(x1, params1)
    jax.block_until_ready(y1)

    y1_ref = jnp.einsum("bsi,oi->bso", x1, w1)
    assert y1.shape == (batch, seq, out_f)
    assert jnp.allclose(y1, y1_ref, atol=1e-5, rtol=1e-5)

    # ---- Test 2: bf16, small tile caps to exercise a (2, 3, 2) grid with K-accumulation,
    #      a partial M edge block (no M padding) and bf16 sublane alignment.
    batch2, seq2, in2, out2 = 2, 60, 256, 384
    w2 = xavier_uniform_weight(k_w2, in2, out2)
    params2 = prepare_linear_norm_params(w2, dtype=jnp.bfloat16, tn_max=128, tk_max=128)
    x2_f32 = jax.random.normal(k_x2, (batch2, seq2, in2), dtype=jnp.float32)
    x2 = x2_f32.astype(jnp.bfloat16)

    y2 = linear_norm_forward(x2, params2, tm_max=64)
    jax.block_until_ready(y2)

    y2_ref = jnp.einsum("bsi,oi->bso", x2_f32, w2)
    assert y2.shape == (batch2, seq2, out2)
    rel_err = jnp.linalg.norm(y2.astype(jnp.float32) - y2_ref) / jnp.linalg.norm(y2_ref)
    assert rel_err < 1e-2, f"bf16 relative error too high: {rel_err}"

    print("KERNEL_OK")
</pallas_src>

<mosaic_0001>
module attributes {stable_mosaic.version = 11 : i64} {
  func.func @_matmul_kernel(%arg0: i32, %arg1: i32, %arg2: i32, %arg3: memref<8x128xf32, #tpu.memory_space<vmem>>, %arg4: memref<128x128xf32, #tpu.memory_space<vmem>>, %arg5: memref<8x128xf32, #tpu.memory_space<vmem>>, %arg6: memref<8x128xf32, #tpu.memory_space<vmem>>) attributes {dimension_semantics = [#tpu.dimension_semantics<parallel>, #tpu.dimension_semantics<parallel>, #tpu.dimension_semantics<arbitrary>], iteration_bounds = array<i64: 2, 1, 1>, scalar_prefetch = 0 : i64, scratch_operands = 1 : i64, tpu.core_type = #tpu.core_type<tc>, window_params = [{transform_indices = @transform_0, window_bounds = array<i64: 8, 128>}, {transform_indices = @transform_1, window_bounds = array<i64: 128, 128>}, {transform_indices = @transform_2, window_bounds = array<i64: 8, 128>}]} {
    %c0_i32 = arith.constant 0 : i32
    %0 = arith.cmpi eq, %arg2, %c0_i32 : i32
    %1 = arith.extui %0 : i1 to i32
    %c0_i32_0 = arith.constant 0 : i32
    %2 = arith.cmpi ne, %1, %c0_i32_0 : i32
    scf.if %2 {
      %cst_10 = arith.constant 0.000000e+00 : f32
      %12 = vector.broadcast %cst_10 : f32 to vector<8x128xf32>
      %c0_11 = arith.constant 0 : index
      %c0_12 = arith.constant 0 : index
      %13 = vector.load %arg6[%c0_11, %c0_12] : memref<8x128xf32, #tpu.memory_space<vmem>>, vector<8x128xf32>
      tpu.vector_store %arg6[%c0_11, %c0_12], %12 {strides = array<i32>} : memref<8x128xf32, #tpu.memory_space<vmem>>, vector<8x128xf32>,
    } else {
    }
    %c0 = arith.constant 0 : index
    %c0_1 = arith.constant 0 : index
    %3 = vector.load %arg6[%c0, %c0_1] : memref<8x128xf32, #tpu.memory_space<vmem>>, vector<8x128xf32>
    %c0_2 = arith.constant 0 : index
    %c0_3 = arith.constant 0 : index
    %4 = vector.load %arg3[%c0_2, %c0_3] : memref<8x128xf32, #tpu.memory_space<vmem>>, vector<8x128xf32>
    %c0_4 = arith.constant 0 : index
    %c0_5 = arith.constant 0 : index
    %5 = vector.load %arg4[%c0_4, %c0_5] : memref<128x128xf32, #tpu.memory_space<vmem>>, vector<128x128xf32>
    %cst = arith.constant dense<0.000000e+00> : vector<8x128xf32>
    %6 = tpu.matmul %4, %5, %cst {dimension_numbers = #tpu.dot_dimension_numbers<[1], [0], [0], [1], [0, 0, 1, 1], [], []>} : vector<8x128xf32>, vector<128x128xf32>, vector<8x128xf32> -> vector<8x128xf32>
    %7 = arith.addf %3, %6 : vector<8x128xf32>
    %c0_6 = arith.constant 0 : index
    %c0_7 = arith.constant 0 : index
    %8 = vector.load %arg6[%c0_6, %c0_7] : memref<8x128xf32, #tpu.memory_space<vmem>>, vector<8x128xf32>
    tpu.vector_store %arg6[%c0_6, %c0_7], %7 {strides = array<i32>} : memref<8x128xf32, #tpu.memory_space<vmem>>, vector<8x128xf32>,
    %c0_i32_8 = arith.constant 0 : i32
    %9 = arith.cmpi eq, %arg2, %c0_i32_8 : i32
    %10 = arith.extui %9 : i1 to i32
    %c0_i32_9 = arith.constant 0 : i32
    %11 = arith.cmpi ne, %10, %c0_i32_9 : i32
    scf.if %11 {
      %c0_10 = arith.constant 0 : index
      %c0_11 = arith.constant 0 : index
      %12 = vector.load %arg6[%c0_10, %c0_11] : memref<8x128xf32, #tpu.memory_space<vmem>>, vector<8x128xf32>
      %c0_12 = arith.constant 0 : index
      %c0_13 = arith.constant 0 : index
      %13 = vector.load %arg5[%c0_12, %c0_13] : memref<8x128xf32, #tpu.memory_space<vmem>>, vector<8x128xf32>
      tpu.vector_store %arg5[%c0_12, %c0_13], %12 {strides = array<i32>} : memref<8x128xf32, #tpu.memory_space<vmem>>, vector<8x128xf32>,
    } else {
    }
    return
  }
  func.func @transform_0(%arg0: i32, %arg1: i32, %arg2: i32) -> (i32, i32) {
    %c0_i32 = arith.constant 0 : i32
    return %arg0, %arg2 : i32, i32
  }
  func.func @transform_1(%arg0: i32, %arg1: i32, %arg2: i32) -> (i32, i32) {
    %c0_i32 = arith.constant 0 : i32
    return %arg2, %arg1 : i32, i32
  }
  func.func @transform_2(%arg0: i32, %arg1: i32, %arg2: i32) -> (i32, i32) {
    %c0_i32 = arith.constant 0 : i32
    return %arg0, %arg1 : i32, i32
  }
}

</mosaic_0001>

<llo_original>
// kernel: tpu_custom_call.1
$region0: #{tpu_custom_call.1}
  #allocation0 [shape = 'u32[]', space=smem, size = 0x4, offset = 0x4, fixed_abs, tag = 'smem constant byte address 0x4 - core index']
  #allocation1 [shape = 'u32[144,128]{1,0:T(1,128)}', space=vmem, size = 0x12000, scoped, tag = 'internal scratch']
  #allocation2 [shape = 'f32[8,128]{1,0:T(8,128)}', space=vmem, size = 0x1000, scoped, tag = 'scratch operand']
  %s0 = inlined_call_operand.hbm [shape: f32[16,128], index: 0, kind: input, shape index: {}]
  %s1 = inlined_call_operand.hbm [shape: f32[128,128], index: 1, kind: input, shape index: {}]
  %s2 = inlined_call_operand.hbm [shape: f32[16,128], index: 2, kind: output, shape index: {}]
  %s3 = sld [smem:[#allocation0]]
  $region57: #{tpu_custom_call.1} parent=0
    _
  %s5 = ssub.s32 1, %s3
  %s6 = scalar_select 0, %s5, %s3
  $region1: #{tpu_custom_call.1} parent=0
    #allocation3 [shape = 'u8[8192]{0}', space=vmem, size = 0x2000, scoped, tag = 'input window, operand 0']
    #allocation4 [shape = 's32[2]{0}', space=sflag, size = 0x8, scoped, tag = 'scoped memory for tpu_custom_call.1']
    #allocation5 [shape = 's32[2]{0}', space=sflag, size = 0x8, scoped, tag = 'scoped memory for tpu_custom_call.1']
    #allocation6 [shape = 'u8[65536]{0}', space=vmem, size = 0x10000, scoped, tag = 'input window, operand 1, single buffered']
    #allocation7 [shape = 's32[1]{0}', space=sflag, size = 0x4, scoped, tag = 'scoped memory for tpu_custom_call.1']
    #allocation8 [shape = 'u8[8192]{0}', space=vmem, size = 0x2000, scoped, tag = 'output window, operand 0']
    %7 = vsyncpa [#allocation4], 0
    %s8 = scalar_lea.sflag [#allocation4], 1
    %9 = vsyncpa %s8, 0
    %10 = vsyncpa [#allocation7], 0
    %11 = vsyncpa [#allocation5], 0
    %s12 = scalar_lea.sflag [#allocation5], 1
    %13 = vsyncpa %s12, 0
    loop: start=0, step=1, limit=4
    $region2: #{tpu_custom_call.1} parent=1 // loop_pre_header
      _
    $region3: #{tpu_custom_call.1} parent=1 // loop_header
      %s15 = sphi 0, %s19
      %p16 = scmp.ge.s32.totalorder %s15, 4
      %s22 = sphi 0, %s41
      %s23 = sphi 0, %s37
      %s24 = sphi 0, %s33
      %s25 = sphi 0, %s22
      %s26 = sphi 0, %s23
      %s27 = sphi 0, %s24
      %s28 = sphi 0, %s25
      %s29 = sphi 0, %s26
      %s30 = sphi 0, %s27
      %s46 = sphi 0, %s48
      %s49 = sphi 0, %s46
      %s50 = sphi 0, %s49
      %s66 = sphi 0, %s50
      %s74 = sphi 0, %s76
      %s77 = sphi 0, %s74
      %s78 = sphi 0, %s77
      %s94 = sphi 0, %s78
      %s102 = sphi 0, %s104
      %s105 = sphi 0, %s102
      %s106 = sphi 0, %s105
      %s122 = sphi 0, %s106
    $region4: #{tpu_custom_call.1} parent=1 // loop_header_branch
      %18 = sbr.rel (%p16) target = $region8
    $region5: #{tpu_custom_call.1} parent=1 // loop_body
      %s20 = ssub.s32 %s15, 1
      %s21 = ssub.s32 %s15, 2
      %s31 = sadd.s32 1, %s24
      %p32 = scmp.ge.s32.totalorder %s31, 1
      %s33 = scalar_select %p32, 0, %s31
      %s34 = sadd.s32 1, %s23
      %s35 = scalar_select %p32, %s34, %s23
      %p36 = scmp.ge.s32.totalorder %s35, 1
      %s37 = scalar_select %p36, 0, %s35
      %s38 = sadd.s32 1, %s22
      %s39 = scalar_select %p36, %s38, %s22
      %p40 = scmp.ge.s32.totalorder %s39, 2
      %s41 = scalar_select %p40, 0, %s39
      %s42 = ssub.s32 %s22, %s41
      %s43 = ssub.s32 %s24, %s33
      %s44 = sor.u32 %s42, %s43
      %p45 = scmp.eq.s32.totalorder %s44, 0
      %s47 = sadd.s32 %s46, 1
      %s48 = scalar_select %p45, %s46, %s47
      %p51 = pneg %p45
      %p52 = scmp.eq.s32.totalorder %s15, 1
      %p53 = por %p51, %p52
      %p54 = scmp.ne.s32.totalorder %s46, %s49
      %p55 = scmp.eq.s32.totalorder %s15, 0
      %p56 = por %p54, %p55
      %p57 = scmp.ne.s32.totalorder %s46, %s49
      %p58 = scmp.eq.s32.totalorder %s20, 1
      %p59 = por %p57, %p58
      %p60 = scmp.ne.s32.totalorder %s49, %s50
      %p61 = scmp.eq.s32.totalorder %s20, 0
      %p62 = por %p60, %p61
      %p63 = scmp.ne.s32.totalorder %s49, %s50
      %p64 = scmp.eq.s32.totalorder %s21, 1
      %p65 = por %p63, %p64
      %p67 = scmp.ne.s32.totalorder %s50, %s66
      %p68 = scmp.eq.s32.totalorder %s21, 0
      %p69 = por %p67, %p68
      %s70 = ssub.s32 %s24, %s33
      %s71 = ssub.s32 %s23, %s37
      %s72 = sor.u32 %s70, %s71
      %p73 = scmp.eq.s32.totalorder %s72, 0
      %s75 = sadd.s32 %s74, 1
      %s76 = scalar_select %p73, %s74, %s75
      %p79 = pneg %p73
      %p80 = scmp.eq.s32.totalorder %s15, 1
      %p81 = por %p79, %p80
      %p82 = scmp.ne.s32.totalorder %s74, %s77
      %p83 = scmp.eq.s32.totalorder %s15, 0
      %p84 = por %p82, %p83
      %p85 = scmp.ne.s32.totalorder %s74, %s77
      %p86 = scmp.eq.s32.totalorder %s20, 1
      %p87 = por %p85, %p86
      %p88 = scmp.ne.s32.totalorder %s77, %s78
      %p89 = scmp.eq.s32.totalorder %s20, 0
      %p90 = por %p88, %p89
      %p91 = scmp.ne.s32.totalorder %s77, %s78
      %p92 = scmp.eq.s32.totalorder %s21, 1
      %p93 = por %p91, %p92
      %p95 = scmp.ne.s32.totalorder %s78, %s94
      %p96 = scmp.eq.s32.totalorder %s21, 0
      %p97 = por %p95, %p96
      %s98 = ssub.s32 %s22, %s41
      %s99 = ssub.s32 %s23, %s37
      %s100 = sor.u32 %s98, %s99
      %p101 = scmp.eq.s32.totalorder %s100, 0
      %s103 = sadd.s32 %s102, 1
      %s104 = scalar_select %p101, %s102, %s103
      %p107 = pneg %p101
      %p108 = scmp.eq.s32.totalorder %s15, 1
      %p109 = por %p107, %p108
      %p110 = scmp.ne.s32.totalorder %s102, %s105
      %p111 = scmp.eq.s32.totalorder %s15, 0
      %p112 = por %p110, %p111
      %p113 = scmp.ne.s32.totalorder %s102, %s105
      %p114 = scmp.eq.s32.totalorder %s20, 1
      %p115 = por %p113, %p114
      %p116 = scmp.ne.s32.totalorder %s105, %s106
      %p117 = scmp.eq.s32.totalorder %s20, 0
      %p118 = por %p116, %p117
      %p119 = scmp.ne.s32.totalorder %s105, %s106
      %p120 = scmp.eq.s32.totalorder %s21, 1
      %p121 = por %p119, %p120
      %p123 = scmp.ne.s32.totalorder %s106, %s122
      %p124 = scmp.eq.s32.totalorder %s21, 0
      %p125 = por %p123, %p124
      %p126 = scmp.le.s32.totalorder 1, %s15
      %p127 = scmp.lt.s32.totalorder %s15, 3
      %p128 = pnand %p126, %p127
      %p129 = pneg %p128
      // Predicated region
      $region9: #{tpu_custom_call.1} parent=5 // pred_check
        _
      $region10: #{tpu_custom_call.1} parent=5 // pred_check_branch
        %131 = sbr.rel (%p128) target = $region12
      $region11: #{tpu_custom_call.1} parent=5 // pred_region
        %s132 = ssub.s32 %s15, 1
        // Predicated region
        $region13: #{tpu_custom_call.1} parent=11 // pred_check
          %p133 = pneg %p90
        $region14: #{tpu_custom_call.1} parent=11 // pred_check_branch
          %135 = sbr.rel (%p133) target = $region16
        $region15: #{tpu_custom_call.1} parent=11 // pred_region
          %s136 = smul.u32 16, %s27
          %s138 = ssub.s32 2048, 2048
          %139 = vsyncadd [#allocation7], %s138
          %s140 = sadd.s32 %s26, %s136
          %s141 = smul.addr %s140, 128
          %s142 = scalar_lea.hbm %s1, %s141
          %s143 = sshll.u32 [#allocation6], 4
          %s144 = int_to_ptr.vmem [resolvable:$true] %s143
          %149 = dma.hbm_to_vmem [thread:$0]  %s142, 2048, %s144, [#allocation7], 128, 128, 8
        $region16: #{tpu_custom_call.1} parent=11 // pred_fallthru
          _
      $region12: #{tpu_custom_call.1} parent=5 // pred_fallthru
        _
      %p150 = scmp.lt.s32.totalorder %s15, 2
      // Predicated region
      $region17: #{tpu_custom_call.1} parent=5 // pred_check
        %p151 = pneg %p150
      $region18: #{tpu_custom_call.1} parent=5 // pred_check_branch
        %153 = sbr.rel (%p151) target = $region20
      $region19: #{tpu_custom_call.1} parent=5 // pred_region
        // Predicated region
        $region21: #{tpu_custom_call.1} parent=19 // pred_check
          %p154 = pneg %p56
        $region22: #{tpu_custom_call.1} parent=19 // pred_check_branch
          %156 = sbr.rel (%p154) target = $region24
        $region23: #{tpu_custom_call.1} parent=19 // pred_region
          %s157 = sand.u32 %s46, 1
          %s158 = scalar_lea.sflag [#allocation4], %s157
          %s159 = sand.u32 %s46, 1
          %s160 = smul.addr %s159, 8
          %s161 = scalar_lea.vmem [#allocation3], %s160
          %s163 = ssub.s32 128, 128
          %164 = vsyncadd %s158, %s163
          %s165 = sadd.s32 %s24, %s22
          %s166 = smul.addr %s165, 128
          %s167 = scalar_lea.hbm %s0, %s166
          %s169 = sshll.u32 %s161, 4
          %s170 = int_to_ptr.vmem [resolvable:$true] %s169
          %172 = dma.hbm_to_vmem [thread:$0]  %s167, 128, %s170, %s158
        $region24: #{tpu_custom_call.1} parent=19 // pred_fallthru
          _
      $region20: #{tpu_custom_call.1} parent=5 // pred_fallthru
        _
      %p173 = scmp.le.s32.totalorder 1, %s15
      %p174 = scmp.lt.s32.totalorder %s15, 3
      %p175 = pnand %p173, %p174
      %p176 = pneg %p175
      // Predicated region
      $region25: #{tpu_custom_call.1} parent=5 // pred_check
        _
      $region26: #{tpu_custom_call.1} parent=5 // pred_check_branch
        %178 = sbr.rel (%p175) target = $region28
      $region27: #{tpu_custom_call.1} parent=5 // pred_region
        %s179 = ssub.s32 %s15, 1
        %s180 = sand.u32 %s49, 1
        %s181 = scalar_lea.sflag [#allocation4], %s180
        %s182 = sand.u32 %s49, 1
        %s183 = smul.addr %s182, 8
        %s184 = scalar_lea.vmem [#allocation3], %s183
        // Predicated region
        $region29: #{tpu_custom_call.1} parent=27 // pred_check
          %p185 = pneg %p62
        $region30: #{tpu_custom_call.1} parent=27 // pred_check_branch
          %187 = sbr.rel (%p185) target = $region32
        $region31: #{tpu_custom_call.1} parent=27 // pred_region
          %188 = dma.done %s181, 128
        $region32: #{tpu_custom_call.1} parent=27 // pred_fallthru
          _
        // Predicated region
        $region33: #{tpu_custom_call.1} parent=27 // pred_check
          %p189 = pneg %p90
        $region34: #{tpu_custom_call.1} parent=27 // pred_check_branch
          %191 = sbr.rel (%p189) target = $region36
        $region35: #{tpu_custom_call.1} parent=27 // pred_region
          %192 = dma.done [#allocation7], 2048
        $region36: #{tpu_custom_call.1} parent=27 // pred_fallthru
          _
        %s193 = sand.u32 %s49, 1
        %s194 = scalar_lea.sflag [#allocation4], %s193
        %s195 = sand.u32 %s49, 1
        %s196 = smul.addr %s195, 8
        %s197 = scalar_lea.vmem [#allocation3], %s196
        %p198 = pneg %p62
        %p199 = pneg %p59
        %p200 = pneg %p90
        %p201 = pneg %p87
        %p202 = pneg %p118
        %p203 = pneg %p115
        %s204 = sand.u32 %s105, 1
        %s205 = scalar_lea.sflag [#allocation5], %s204
        %s206 = sand.u32 %s105, 1
        %s207 = smul.addr %s206, 8
        %s208 = scalar_lea.vmem [#allocation8], %s207
        %s209 = smul.u32 16, %s27
        %p210 = scmp.eq.s32.totalorder %s27, 0
        // Predicated region
        $region37: #{tpu_custom_call.1} parent=27 // pred_check
          %p211 = pneg %p210
        $region38: #{tpu_custom_call.1} parent=27 // pred_check_branch
          %213 = sbr.rel (%p211) target = $region40
        $region39: #{tpu_custom_call.1} parent=27 // pred_region
          %214 = vst [vmem:[#allocation2] sm:$0xff] 0.0
        $region40: #{tpu_custom_call.1} parent=27 // pred_fallthru
          _
        %v215 = vld [vmem:[#allocation2] sm:$0xff]
        %v216 = vld [vmem:[%s184] sm:$0xff]
        %v217 = vld [vmem:[#allocation6] sm:$0xff]
        %v218 = vld [vmem:[#allocation6 + $0x8] sm:$0xff]
        %v219 = vld [vmem:[#allocation6 + $0x10] sm:$0xff]
        %v220 = vld [vmem:[#allocation6 + $0x18] sm:$0xff]
        %v221 = vld [vmem:[#allocation6 + $0x20] sm:$0xff]
        %v222 = vld [vmem:[#allocation6 + $0x28] sm:$0xff]
        %v223 = vld [vmem:[#allocation6 + $0x30] sm:$0xff]
        %v224 = vld [vmem:[#allocation6 + $0x38] sm:$0xff]
        %v225 = vld [vmem:[#allocation6 + $0x40] sm:$0xff]
        %v226 = vld [vmem:[#allocation6 + $0x48] sm:$0xff]
        %v227 = vld [vmem:[#allocation6 + $0x50] sm:$0xff]
        %v228 = vld [vmem:[#allocation6 + $0x58] sm:$0xff]
        %v229 = vld [vmem:[#allocation6 + $0x60] sm:$0xff]
        %v230 = vld [vmem:[#allocation6 + $0x68] sm:$0xff]
        %v231 = vld [vmem:[#allocation6 + $0x70] sm:$0xff]
        %v232 = vld [vmem:[#allocation6 + $0x78] sm:$0xff]
        %233 = vmatprep.subr.mxu0 0.0
        %234 = vmatpush1.msra.mxu0 %v217
        %235 = vmatprep.subr.mxu0 0.0
        %236 = vmatpush1.msra.mxu0 %v218
        %237 = vmatprep.subr.mxu0 0.0
        %238 = vmatpush1.msra.mxu0 %v219
        %239 = vmatprep.subr.mxu0 0.0
        %240 = vmatpush1.msra.mxu0 %v220
        %241 = vmatprep.subr.mxu0 0.0
        %242 = vmatpush1.msra.mxu0 %v221
        %243 = vmatprep.subr.mxu0 0.0
        %244 = vmatpush1.msra.mxu0 %v222
        %245 = vmatprep.subr.mxu0 0.0
        %246 = vmatpush1.msra.mxu0 %v223
        %247 = vmatprep.subr.mxu0 0.0
        %248 = vmatpush1.msra.mxu0 %v224
        %249 = vmatprep.subr.mxu0 0.0
        %250 = vmatpush1.msra.mxu0 %v225
        %251 = vmatprep.subr.mxu0 0.0
        %252 = vmatpush1.msra.mxu0 %v226
        %253 = vmatprep.subr.mxu0 0.0
        %254 = vmatpush1.msra.mxu0 %v227
        %255 = vmatprep.subr.mxu0 0.0
        %256 = vmatpush1.msra.mxu0 %v228
        %257 = vmatprep.subr.mxu0 0.0
        %258 = vmatpush1.msra.mxu0 %v229
        %259 = vmatprep.subr.mxu0 0.0
        %260 = vmatpush1.msra.mxu0 %v230
        %261 = vmatprep.subr.mxu0 0.0
        %262 = vmatpush1.msra.mxu0 %v231
        %263 = vmatprep.subr.mxu0 0.0
        %264 = vmatpush1.msra.mxu0 %v232
        %265 = vmatprep.subr.mxu0 0.0
        %266 = vmatpush1.msra.mxu0 0.0
        %267 = vmatprep.subr.mxu0 0.0
        %268 = vmatpush1.msra.mxu0 0.0
        %269 = vmatprep.subr.mxu0 0.0
        %270 = vmatpush1.msra.mxu0 0.0
        %271 = vmatprep.subr.mxu0 0.0
        %272 = vmatpush1.msra.mxu0 0.0
        %273 = vmatprep.subr.mxu0 0.0
        %274 = vmatpush1.msra.mxu0 0.0
        %275 = vmatprep.subr.mxu0 0.0
        %276 = vmatpush1.msra.mxu0 0.0
        %277 = vmatprep.subr.mxu0 0.0
        %278 = vmatpush1.msra.mxu0 0.0
        %279 = vmatprep.subr.mxu0 0.0
        %280 = vmatpush1.msra.mxu0 0.0
        %281 = vmatprep.subr.mxu0 0.0
        %282 = vmatpush1.msra.mxu0 0.0
        %283 = vmatprep.subr.mxu0 0.0
        %284 = vmatpush1.msra.mxu0 0.0
        %285 = vmatprep.subr.mxu0 0.0
        %286 = vmatpush1.msra.mxu0 0.0
        %287 = vmatprep.subr.mxu0 0.0
        %288 = vmatpush1.msra.mxu0 0.0
        %289 = vmatprep.subr.mxu0 0.0
        %290 = vmatpush1.msra.mxu0 0.0
        %291 = vmatprep.subr.mxu0 0.0
        %292 = vmatpush1.msra.mxu0 0.0
        %293 = vmatprep.subr.mxu0 0.0
        %294 = vmatpush1.msra.mxu0 0.0
        %295 = vmatprep.subr.mxu0 0.0
        %296 = vmatpush1.msra.mxu0 0.0
        %297 = vmatprep.mubr.f32.mxu0 0.0
        %298 = vmatmul.mubr.f32.gmra.mrb[0].mxu0 %v216
        %v299 = vpop.f32.mrb[0].mxu0
        %v300 = vadd.f32 0.0, %v299
        %v301 = vpop.f32.mrb[0].mxu0
        %302 = vdwg.mxu0
        %v303 = vadd.f32 %v215, %v300
        %304 = vst [vmem:[#allocation2] sm:$0xff] %v303
        // Predicated region
        $region41: #{tpu_custom_call.1} parent=27 // pred_check
          %p305 = pneg %p210
        $region42: #{tpu_custom_call.1} parent=27 // pred_check_branch
          %307 = sbr.rel (%p305) target = $region44
        $region43: #{tpu_custom_call.1} parent=27 // pred_region
          %v308 = vld [vmem:[#allocation2] sm:$0xff]
          %309 = vst [vmem:[%s208] sm:$0xff] %v308
        $region44: #{tpu_custom_call.1} parent=27 // pred_fallthru
          _
        %s310 = sand.u32 %s105, 1
        %s311 = scalar_lea.sflag [#allocation5], %s310
        %s312 = sand.u32 %s105, 1
        %s313 = smul.addr %s312, 8
        %s314 = scalar_lea.vmem [#allocation8], %s313
        // Predicated region
        $region45: #{tpu_custom_call.1} parent=27 // pred_check
          %p315 = pneg %p115
        $region46: #{tpu_custom_call.1} parent=27 // pred_check_branch
          %317 = sbr.rel (%p315) target = $region48
        $region47: #{tpu_custom_call.1} parent=27 // pred_region
          %s319 = ssub.s32 128, 128
          %320 = vsyncadd %s311, %s319
          %s321 = sadd.s32 %s26, %s25
          %s322 = smul.addr %s321, 128
          %s323 = scalar_lea.hbm %s2, %s322
          %s325 = sshll.u32 %s314, 4
          %s326 = int_to_ptr.vmem [resolvable:$true] %s325
          %328 = dma.vmem_to_hbm [thread:$0]  %s326, 128, %s323, %s311
        $region48: #{tpu_custom_call.1} parent=27 // pred_fallthru
          _
      $region28: #{tpu_custom_call.1} parent=5 // pred_fallthru
        _
      %p329 = scmp.le.s32.totalorder 2, %s15
      // Predicated region
      $region49: #{tpu_custom_call.1} parent=5 // pred_check
        %p330 = pneg %p329
      $region50: #{tpu_custom_call.1} parent=5 // pred_check_branch
        %332 = sbr.rel (%p330) target = $region52
      $region51: #{tpu_custom_call.1} parent=5 // pred_region
        %s333 = ssub.s32 %s15, 2
        // Predicated region
        $region53: #{tpu_custom_call.1} parent=51 // pred_check
          %p334 = pneg %p121
        $region54: #{tpu_custom_call.1} parent=51 // pred_check_branch
          %336 = sbr.rel (%p334) target = $region56
        $region55: #{tpu_custom_call.1} parent=51 // pred_region
          %s337 = sand.u32 %s106, 1
          %s338 = scalar_lea.sflag [#allocation5], %s337
          %s339 = sand.u32 %s106, 1
          %s340 = smul.addr %s339, 8
          %s341 = scalar_lea.vmem [#allocation8], %s340
          %342 = dma.done %s338, 128
        $region56: #{tpu_custom_call.1} parent=51 // pred_fallthru
          _
      $region52: #{tpu_custom_call.1} parent=5 // pred_fallthru
        _
    $region6: #{tpu_custom_call.1} parent=1 // loop_footer
      %s19 = sadd.s32 1, %s15
    $region7: #{tpu_custom_call.1} parent=1 // loop_footer_branch
      %14 = sbr.rel target = $region3
    $region8: #{tpu_custom_call.1} parent=1 // loop_exit
      _
    %343 = vsyncpa [#allocation4], 1
    %s344 = scalar_lea.sflag [#allocation4], 1
    %345 = vsyncpa %s344, 1
    %346 = vsyncpa [#allocation7], 1
    %347 = vsyncpa [#allocation5], 1
    %s348 = scalar_lea.sflag [#allocation5], 1
    %349 = vsyncpa %s348, 1

</llo_original>
